<compile_context>
chip_gen: v7x
topology: tpu7x:2x2x1
jax: 0.10.0
libtpu: 0.0.40
codegen_flags: <defaults>
</compile_context>

<pallas_src>
import functools

import jax
import jax.numpy as jnp
from jax.experimental import pallas as pl
from jax.experimental.pallas import tpu as pltpu


def _round_up(v, mult):
    return ((v + mult - 1) // mult) * mult


@functools.lru_cache(maxsize=1)
def _hw_params():
    """Generation-aware (vmem_budget_bytes, target_bytes_per_step, num_cores)."""
    try:
        vmem_cap = int(pltpu.get_tpu_info().vmem_capacity_bytes)
    except Exception:  # unknown hardware -> conservative (v7x-like) settings
        vmem_cap = 0
    if vmem_cap >= 100 * 1024 * 1024:
        # v5e / v6e: 128 MiB physical VMEM, 1 TensorCore, 0.8-1.4 TB/s HBM.
        return 96 * 1024 * 1024, 4 * 1024 * 1024, 1
    # v7x-like (64 MiB physical VMEM) or unknown: leave headroom for
    # compiler-internal scratch, larger per-step byte target (3.2 TB/s HBM),
    # and 2 TensorCores that need >= 2 parallel grid steps.
    return 48 * 1024 * 1024, 10 * 1024 * 1024, 2


def _proj_kernel(x_ref, w_ref, b_ref, o_ref):
    # x_ref: (bn, C_in, tm)  w_ref: (tco, C_in)  b_ref: (tco, 1)
    # o_ref: (bn, tco, tm)
    w = w_ref[...]
    b = b_ref[...]
    # bn is a small static int -> unrolled; each sample is a plain 2-D matmul
    # (MXU under-utilized at tiny K, but the kernel is HBM-bound so this is
    # hidden under DMA).
    for s in range(x_ref.shape[0]):
        acc = jnp.dot(w, x_ref[s], preferred_element_type=jnp.float32)
        o_ref[s] = (acc + b).astype(o_ref.dtype)


def _proj_kernel_kred(x_ref, w_ref, b_ref, o_ref, acc_ref):
    # Large-C_in path: the contraction is split over the last ("arbitrary")
    # grid axis; acc_ref is an f32 VMEM accumulator resident across it.
    # x_ref: (bn, tk, tm)  w_ref: (tco, tk)  b_ref: (tco, 1)
    # o_ref, acc_ref: (bn, tco, tm)
    k = pl.program_id(3)

    @pl.when(k == 0)
    def _():
        acc_ref[...] = jnp.zeros_like(acc_ref)

    w = w_ref[...]
    for s in range(x_ref.shape[0]):
        acc_ref[s] += jnp.dot(w, x_ref[s], preferred_element_type=jnp.float32)

    @pl.when(k == pl.num_programs(3) - 1)
    def _():
        b = b_ref[...]
        for s in range(o_ref.shape[0]):
            o_ref[s] = (acc_ref[s] + b).astype(o_ref.dtype)


@functools.partial(jax.jit, static_argnames=("tm_max",))
def projection_forward(x, weight, bias, tm_max=131072):
    """1x1x1 Conv3d projection.

    x:      (N, C_in, D, H, W)       float32
    weight: (C_out, C_in, 1, 1, 1)   (PyTorch Conv3d layout)
    bias:   (C_out,)
    returns (N, C_out, D, H, W)
    """
    n, c_in, d, h, w = x.shape
    c_out = weight.shape[0]
    m = d * h * w

    # Contiguous views only — no transposes, no padding copies in HBM.
    x3 = x.reshape(n, c_in, m)                    # (N, C_in, M)
    w2 = weight.reshape(c_out, c_in)              # (C_out, C_in)
    b2 = bias.reshape(c_out, 1)                   # (C_out, 1)

    vmem_budget, target_step_bytes, num_cores = _hw_params()

    m_rounded = _round_up(m, 128)
    c_in_sub = _round_up(c_in, 8)                 # sublane padding (f32)
    c_out_sub = _round_up(c_out, 8)

    # ---- C_in reduction split: only when large AND exactly divisible, so the
    # last K block never folds out-of-bounds channels into the contraction.
    tk = c_in
    if c_in > 512 and c_in % 128 == 0:
        for cand in (512, 384, 256, 128):
            if c_in % cand == 0:
                tk = cand
                break
    k_blocks = pl.cdiv(c_in, tk)

    # ---- C_out split: keep W/bias fully resident when small, block when
    # large so the tiles fit a 64-MiB-VMEM part. (Blocking C_out re-reads the
    # x tile once per C_out block — the price of fitting VMEM.)
    tco = c_out if c_out <= 1024 else 512
    co_blocks = pl.cdiv(c_out, tco)

    # ---- Multi-sample blocking for the small-M / large-N regime so each grid
    # step still moves multi-MB DMAs. Capped at 8 to bound kernel unrolling.
    voxel_bytes = 4 * (c_in_sub + c_out_sub)      # HBM bytes per voxel (in+out)
    bn = max(1, min(n, 8, target_step_bytes // max(m_rounded * voxel_bytes, 1)))
    n_blocks = pl.cdiv(n, bn)

    # ---- Lane tile sized by HBM bytes per grid step (not voxel count).
    tm = (target_step_bytes // max(bn * voxel_bytes, 1)) // 128 * 128
    tm = max(128, min(tm, (tm_max // 128) * 128, m_rounded))

    # 2-TensorCore parts: guarantee >= 2 parallel grid steps to shard.
    if num_cores >= 2 and n_blocks * co_blocks == 1 and tm >= m and m > 128:
        tm = max(128, _round_up(pl.cdiv(m, 2), 128))

    # ---- Honest VMEM footprint: sublane/lane padding + double buffers.
    def _footprint(bn_, tm_, tco_, tk_, with_acc):
        xb = 2 * bn_ * _round_up(tk_, 8) * tm_ * 4          # x tile x2 buffers
        ob = 2 * bn_ * _round_up(tco_, 8) * tm_ * 4         # out tile x2 buffers
        wb = 2 * _round_up(tco_, 8) * _round_up(tk_, 128) * 4
        bb = 2 * _round_up(tco_, 8) * 128 * 4
        ab = bn_ * _round_up(tco_, 8) * tm_ * 4 if with_acc else 0
        return xb + ob + wb + bb + ab

    with_acc = k_blocks > 1
    while _footprint(bn, tm, tco, tk, with_acc) > vmem_budget and tm > 128:
        tm = max(128, (tm // 2) // 128 * 128)
    while _footprint(bn, tm, tco, tk, with_acc) > vmem_budget and bn > 1:
        bn = max(1, bn // 2)
    while _footprint(bn, tm, tco, tk, with_acc) > vmem_budget and tco > 128:
        tco = max(128, _round_up(tco // 2, 8))

    n_blocks = pl.cdiv(n, bn)
    co_blocks = pl.cdiv(c_out, tco)
    m_blocks = pl.cdiv(m, tm)

    cost = pl.CostEstimate(
        flops=2 * n * m * c_in * c_out,
        transcendentals=0,
        bytes_accessed=4 * (n * m * c_in + n * m * c_out + c_in * c_out + c_out),
    )

    if k_blocks == 1:
        grid = (n_blocks, co_blocks, m_blocks)
        kernel = _proj_kernel
        in_specs = [
            pl.BlockSpec((bn, c_in, tm), lambda b, co, j: (b, 0, j)),
            pl.BlockSpec((tco, c_in), lambda b, co, j: (co, 0)),
            pl.BlockSpec((tco, 1), lambda b, co, j: (co, 0)),
        ]
        out_specs = pl.BlockSpec((bn, tco, tm), lambda b, co, j: (b, co, j))
        scratch_shapes = []
        dim_sem = ("parallel", "parallel", "parallel")
    else:
        grid = (n_blocks, co_blocks, m_blocks, k_blocks)   # reduction axis last
        kernel = _proj_kernel_kred
        in_specs = [
            pl.BlockSpec((bn, tk, tm), lambda b, co, j, k: (b, k, j)),
            pl.BlockSpec((tco, tk), lambda b, co, j, k: (co, k)),
            pl.BlockSpec((tco, 1), lambda b, co, j, k: (co, 0)),
        ]
        out_specs = pl.BlockSpec((bn, tco, tm), lambda b, co, j, k: (b, co, j))
        scratch_shapes = [pltpu.VMEM((bn, tco, tm), jnp.float32)]
        dim_sem = ("parallel", "parallel", "parallel", "arbitrary")

    out3 = pl.pallas_call(
        kernel,
        out_shape=jax.ShapeDtypeStruct((n, c_out, m), x.dtype),
        grid_spec=pltpu.PrefetchScalarGridSpec(
            num_scalar_prefetch=0,
            grid=grid,
            in_specs=in_specs,
            out_specs=out_specs,
            scratch_shapes=scratch_shapes,
        ),
        compiler_params=pltpu.CompilerParams(
            dimension_semantics=dim_sem,
            vmem_limit_bytes=vmem_budget,
        ),
        cost_estimate=cost,
    )(x3, w2, b2)

    return out3.reshape(n, c_out, d, h, w)        # plain reshape back to NCDHW


def init_projection_params(key, c_in, c_out):
    """Deterministic init matching Conv3d(C_in, C_out, k=1) parameter shapes."""
    k_w, k_b = jax.random.split(key)
    fan_in = c_in  # kernel volume = 1
    bound = 1.0 / (fan_in ** 0.5)
    weight = jax.random.uniform(
        k_w, (c_out, c_in, 1, 1, 1), jnp.float32, minval=-bound, maxval=bound
    )
    bias = jax.random.uniform(
        k_b, (c_out,), jnp.float32, minval=-bound, maxval=bound
    )
    return weight, bias


if __name__ == "__main__":
    key = jax.random.PRNGKey(0)
    k_x, k_p = jax.random.split(key)

    # channels = (4, 8); small 3D volume: N=2, D=4, H=8, W=8
    N, C_IN, C_OUT, D, H, W = 2, 4, 8, 4, 8, 8
    x = jax.random.normal(k_x, (N, C_IN, D, H, W), jnp.float32)
    weight, bias = init_projection_params(k_p, C_IN, C_OUT)

    y = projection_forward(x, weight, bias)
    y = jax.block_until_ready(y)

    # Reference (plain JAX) check of the 1x1x1 conv semantics.
    ref = jnp.einsum("ncdhw,oc->nodhw", x, weight.reshape(C_OUT, C_IN)) \
        + bias.reshape(1, C_OUT, 1, 1, 1)
    assert y.shape == (N, C_OUT, D, H, W)
    assert jnp.allclose(y, ref, atol=1e-5, rtol=1e-5)

    print("KERNEL_OK")
</pallas_src>

<mosaic_0001>
module attributes {stable_mosaic.version = 11 : i64} {
  func.func @_proj_kernel(%arg0: i32, %arg1: i32, %arg2: i32, %arg3: memref<2x4x128xf32, #tpu.memory_space<vmem>>, %arg4: memref<8x4xf32, #tpu.memory_space<vmem>>, %arg5: memref<8x1xf32, #tpu.memory_space<vmem>>, %arg6: memref<2x8x128xf32, #tpu.memory_space<vmem>>) attributes {dimension_semantics = [#tpu.dimension_semantics<parallel>, #tpu.dimension_semantics<parallel>, #tpu.dimension_semantics<parallel>], iteration_bounds = array<i64: 1, 1, 2>, scalar_prefetch = 0 : i64, scratch_operands = 0 : i64, tpu.core_type = #tpu.core_type<tc>, window_params = [{transform_indices = @transform_0, window_bounds = array<i64: 2, 4, 128>}, {transform_indices = @transform_1, window_bounds = array<i64: 8, 4>}, {transform_indices = @transform_2, window_bounds = array<i64: 8, 1>}, {transform_indices = @transform_3, window_bounds = array<i64: 2, 8, 128>}]} {
    %c0 = arith.constant 0 : index
    %c0_0 = arith.constant 0 : index
    %0 = vector.load %arg4[%c0, %c0_0] : memref<8x4xf32, #tpu.memory_space<vmem>>, vector<8x4xf32>
    %c0_1 = arith.constant 0 : index
    %c0_2 = arith.constant 0 : index
    %1 = vector.load %arg5[%c0_1, %c0_2] : memref<8x1xf32, #tpu.memory_space<vmem>>, vector<8x1xf32>
    %c0_3 = arith.constant 0 : index
    %c0_4 = arith.constant 0 : index
    %c0_5 = arith.constant 0 : index
    %2 = vector.load %arg3[%c0_3, %c0_4, %c0_5] : memref<2x4x128xf32, #tpu.memory_space<vmem>>, vector<1x4x128xf32>
    %3 = vector.shape_cast %2 : vector<1x4x128xf32> to vector<4x128xf32>
    %cst = arith.constant dense<0.000000e+00> : vector<8x128xf32>
    %4 = tpu.matmul %0, %3, %cst {dimension_numbers = #tpu.dot_dimension_numbers<[1], [0], [0], [1], [0, 0, 1, 1], [], []>} : vector<8x4xf32>, vector<4x128xf32>, vector<8x128xf32> -> vector<8x128xf32>
    %5 = vector.broadcast %1 : vector<8x1xf32> to vector<8x128xf32>
    %6 = arith.addf %4, %5 : vector<8x128xf32>
    %c0_6 = arith.constant 0 : index
    %c0_7 = arith.constant 0 : index
    %c0_8 = arith.constant 0 : index
    %7 = vector.load %arg6[%c0_6, %c0_7, %c0_8] : memref<2x8x128xf32, #tpu.memory_space<vmem>>, vector<1x8x128xf32>
    %8 = vector.shape_cast %7 : vector<1x8x128xf32> to vector<8x128xf32>
    %9 = vector.shape_cast %6 : vector<8x128xf32> to vector<1x8x128xf32>
    tpu.vector_store %arg6[%c0_6, %c0_7, %c0_8], %9 {strides = array<i32>} : memref<2x8x128xf32, #tpu.memory_space<vmem>>, vector<1x8x128xf32>,
    %c1 = arith.constant 1 : index
    %c0_9 = arith.constant 0 : index
    %c0_10 = arith.constant 0 : index
    %10 = vector.load %arg3[%c1, %c0_9, %c0_10] : memref<2x4x128xf32, #tpu.memory_space<vmem>>, vector<1x4x128xf32>
    %11 = vector.shape_cast %10 : vector<1x4x128xf32> to vector<4x128xf32>
    %cst_11 = arith.constant dense<0.000000e+00> : vector<8x128xf32>
    %12 = tpu.matmul %0, %11, %cst_11 {dimension_numbers = #tpu.dot_dimension_numbers<[1], [0], [0], [1], [0, 0, 1, 1], [], []>} : vector<8x4xf32>, vector<4x128xf32>, vector<8x128xf32> -> vector<8x128xf32>
    %13 = vector.broadcast %1 : vector<8x1xf32> to vector<8x128xf32>
    %14 = arith.addf %12, %13 : vector<8x128xf32>
    %c1_12 = arith.constant 1 : index
    %c0_13 = arith.constant 0 : index
    %c0_14 = arith.constant 0 : index
    %15 = vector.load %arg6[%c1_12, %c0_13, %c0_14] : memref<2x8x128xf32, #tpu.memory_space<vmem>>, vector<1x8x128xf32>
    %16 = vector.shape_cast %15 : vector<1x8x128xf32> to vector<8x128xf32>
    %17 = vector.shape_cast %14 : vector<8x128xf32> to vector<1x8x128xf32>
    tpu.vector_store %arg6[%c1_12, %c0_13, %c0_14], %17 {strides = array<i32>} : memref<2x8x128xf32, #tpu.memory_space<vmem>>, vector<1x8x128xf32>,
    return
  }
  func.func @transform_0(%arg0: i32, %arg1: i32, %arg2: i32) -> (i32, i32, i32) {
    %c0_i32 = arith.constant 0 : i32
    %c0_i32_0 = arith.constant 0 : i32
    return %arg0, %c0_i32, %arg2 : i32, i32, i32
  }
  func.func @transform_1(%arg0: i32, %arg1: i32, %arg2: i32) -> (i32, i32) {
    %c0_i32 = arith.constant 0 : i32
    %c0_i32_0 = arith.constant 0 : i32
    return %arg1, %c0_i32 : i32, i32
  }
  func.func @transform_2(%arg0: i32, %arg1: i32, %arg2: i32) -> (i32, i32) {
    %c0_i32 = arith.constant 0 : i32
    %c0_i32_0 = arith.constant 0 : i32
    return %arg1, %c0_i32 : i32, i32
  }
  func.func @transform_3(%arg0: i32, %arg1: i32, %arg2: i32) -> (i32, i32, i32) {
    %c0_i32 = arith.constant 0 : i32
    return %arg0, %arg1, %arg2 : i32, i32, i32
  }
}

</mosaic_0001>

<llo_original>
// kernel: projection_forward.1
$region0: #{projection_forward.1}
  #allocation0 [shape = 'u32[]', space=smem, size = 0x4, offset = 0x4, fixed_abs, tag = 'smem constant byte address 0x4 - core index']
  #allocation1 [shape = 'u32[144,128]{1,0:T(1,128)}', space=vmem, size = 0x12000, scoped, tag = 'internal scratch']
  %s0 = inlined_call_operand.vmem [shape: f32[2,4,256], index: 0, kind: input, shape index: {}]
  %s1 = inlined_call_operand.vmem [shape: f32[8,4], index: 1, kind: input, shape index: {}]
  %s2 = inlined_call_operand.vmem [shape: f32[8,1], index: 2, kind: input, shape index: {}]
  %s3 = inlined_call_operand.vmem [shape: f32[2,8,256], index: 3, kind: output, shape index: {}]
  %s4 = sld [smem:[#allocation0]]
  $region120: #{projection_forward.1} parent=0
    _
  %s6 = ssub.s32 1, %s4
  %s7 = scalar_select 0, %s6, %s4
  $region1: #{projection_forward.1} parent=0
    #allocation2 [shape = 'u8[8192]{0}', space=vmem, size = 0x2000, scoped, tag = 'input window, operand 0']
    #allocation3 [shape = 'u8[16384]{0}', space=vmem, size = 0x4000, scoped, tag = 'output window, operand 0']
    loop: start=0, step=1, limit=4
    $region2: #{projection_forward.1} parent=1 // loop_pre_header
      _
    $region3: #{projection_forward.1} parent=1 // loop_header
      %s9 = sphi 0, %s13
      %p10 = scmp.ge.s32.totalorder %s9, 4
      %s16 = sphi 0, %s35
      %s17 = sphi 0, %s31
      %s18 = sphi 0, %s27
      %s19 = sphi 0, %s16
      %s20 = sphi 0, %s17
      %s21 = sphi 0, %s18
      %s22 = sphi 0, %s19
      %s23 = sphi 0, %s20
      %s24 = sphi 0, %s21
      %s40 = sphi 0, %s42
      %s43 = sphi 0, %s40
      %s44 = sphi 0, %s43
      %s60 = sphi 0, %s44
      %s66 = sphi 0, %s68
      %s69 = sphi 0, %s66
      %s70 = sphi 0, %s69
      %s86 = sphi 0, %s70
      %s92 = sphi 0, %s94
      %s95 = sphi 0, %s92
      %s96 = sphi 0, %s95
      %s112 = sphi 0, %s96
      %s122 = sphi 0, %s124
      %s125 = sphi 0, %s122
      %s126 = sphi 0, %s125
      %s142 = sphi 0, %s126
    $region4: #{projection_forward.1} parent=1 // loop_header_branch
      %12 = sbr.rel (%p10) target = $region8
    $region5: #{projection_forward.1} parent=1 // loop_body
      %s14 = ssub.s32 %s9, 1
      %s15 = ssub.s32 %s9, 2
      %s25 = sadd.s32 1, %s18
      %p26 = scmp.ge.s32.totalorder %s25, 2
      %s27 = scalar_select %p26, 0, %s25
      %s28 = sadd.s32 1, %s17
      %s29 = scalar_select %p26, %s28, %s17
      %p30 = scmp.ge.s32.totalorder %s29, 1
      %s31 = scalar_select %p30, 0, %s29
      %s32 = sadd.s32 1, %s16
      %s33 = scalar_select %p30, %s32, %s16
      %p34 = scmp.ge.s32.totalorder %s33, 1
      %s35 = scalar_select %p34, 0, %s33
      %s36 = ssub.s32 %s16, %s35
      %s37 = ssub.s32 %s18, %s27
      %s38 = sor.u32 %s36, %s37
      %p39 = scmp.eq.s32.totalorder %s38, 0
      %s41 = sadd.s32 %s40, 1
      %s42 = scalar_select %p39, %s40, %s41
      %p45 = pneg %p39
      %p46 = scmp.eq.s32.totalorder %s9, 1
      %p47 = por %p45, %p46
      %p48 = scmp.ne.s32.totalorder %s40, %s43
      %p49 = scmp.eq.s32.totalorder %s9, 0
      %p50 = por %p48, %p49
      %p51 = scmp.ne.s32.totalorder %s40, %s43
      %p52 = scmp.eq.s32.totalorder %s14, 1
      %p53 = por %p51, %p52
      %p54 = scmp.ne.s32.totalorder %s43, %s44
      %p55 = scmp.eq.s32.totalorder %s14, 0
      %p56 = por %p54, %p55
      %p57 = scmp.ne.s32.totalorder %s43, %s44
      %p58 = scmp.eq.s32.totalorder %s15, 1
      %p59 = por %p57, %p58
      %p61 = scmp.ne.s32.totalorder %s44, %s60
      %p62 = scmp.eq.s32.totalorder %s15, 0
      %p63 = por %p61, %p62
      %s64 = ssub.s32 %s17, %s31
      %p65 = scmp.eq.s32.totalorder %s64, 0
      %s67 = sadd.s32 %s66, 1
      %s68 = scalar_select %p65, %s66, %s67
      %p71 = pneg %p65
      %p72 = scmp.eq.s32.totalorder %s9, 1
      %p73 = por %p71, %p72
      %p74 = scmp.ne.s32.totalorder %s66, %s69
      %p75 = scmp.eq.s32.totalorder %s9, 0
      %p76 = por %p74, %p75
      %p77 = scmp.ne.s32.totalorder %s66, %s69
      %p78 = scmp.eq.s32.totalorder %s14, 1
      %p79 = por %p77, %p78
      %p80 = scmp.ne.s32.totalorder %s69, %s70
      %p81 = scmp.eq.s32.totalorder %s14, 0
      %p82 = por %p80, %p81
      %p83 = scmp.ne.s32.totalorder %s69, %s70
      %p84 = scmp.eq.s32.totalorder %s15, 1
      %p85 = por %p83, %p84
      %p87 = scmp.ne.s32.totalorder %s70, %s86
      %p88 = scmp.eq.s32.totalorder %s15, 0
      %p89 = por %p87, %p88
      %s90 = ssub.s32 %s17, %s31
      %p91 = scmp.eq.s32.totalorder %s90, 0
      %s93 = sadd.s32 %s92, 1
      %s94 = scalar_select %p91, %s92, %s93
      %p97 = pneg %p91
      %p98 = scmp.eq.s32.totalorder %s9, 1
      %p99 = por %p97, %p98
      %p100 = scmp.ne.s32.totalorder %s92, %s95
      %p101 = scmp.eq.s32.totalorder %s9, 0
      %p102 = por %p100, %p101
      %p103 = scmp.ne.s32.totalorder %s92, %s95
      %p104 = scmp.eq.s32.totalorder %s14, 1
      %p105 = por %p103, %p104
      %p106 = scmp.ne.s32.totalorder %s95, %s96
      %p107 = scmp.eq.s32.totalorder %s14, 0
      %p108 = por %p106, %p107
      %p109 = scmp.ne.s32.totalorder %s95, %s96
      %p110 = scmp.eq.s32.totalorder %s15, 1
      %p111 = por %p109, %p110
      %p113 = scmp.ne.s32.totalorder %s96, %s112
      %p114 = scmp.eq.s32.totalorder %s15, 0
      %p115 = por %p113, %p114
      %s116 = ssub.s32 %s16, %s35
      %s117 = ssub.s32 %s17, %s31
      %s118 = sor.u32 %s116, %s117
      %s119 = ssub.s32 %s18, %s27
      %s120 = sor.u32 %s118, %s119
      %p121 = scmp.eq.s32.totalorder %s120, 0
      %s123 = sadd.s32 %s122, 1
      %s124 = scalar_select %p121, %s122, %s123
      %p127 = pneg %p121
      %p128 = scmp.eq.s32.totalorder %s9, 1
      %p129 = por %p127, %p128
      %p130 = scmp.ne.s32.totalorder %s122, %s125
      %p131 = scmp.eq.s32.totalorder %s9, 0
      %p132 = por %p130, %p131
      %p133 = scmp.ne.s32.totalorder %s122, %s125
      %p134 = scmp.eq.s32.totalorder %s14, 1
      %p135 = por %p133, %p134
      %p136 = scmp.ne.s32.totalorder %s125, %s126
      %p137 = scmp.eq.s32.totalorder %s14, 0
      %p138 = por %p136, %p137
      %p139 = scmp.ne.s32.totalorder %s125, %s126
      %p140 = scmp.eq.s32.totalorder %s15, 1
      %p141 = por %p139, %p140
      %p143 = scmp.ne.s32.totalorder %s126, %s142
      %p144 = scmp.eq.s32.totalorder %s15, 0
      %p145 = por %p143, %p144
      %p146 = scmp.le.s32.totalorder 1, %s9
      %p147 = scmp.lt.s32.totalorder %s9, 3
      %p148 = pnand %p146, %p147
      %p149 = pneg %p148
      // Predicated region
      $region9: #{projection_forward.1} parent=5 // pred_check
        _
      $region10: #{projection_forward.1} parent=5 // pred_check_branch
        %151 = sbr.rel (%p148) target = $region12
      $region11: #{projection_forward.1} parent=5 // pred_region
        %s152 = ssub.s32 %s9, 1
        // Predicated region
        $region13: #{projection_forward.1} parent=11 // pred_check
          %p153 = pneg %p82
        $region14: #{projection_forward.1} parent=11 // pred_check_branch
          %155 = sbr.rel (%p153) target = $region16
        $region15: #{projection_forward.1} parent=11 // pred_region
          %p156 = scmp.lt.s32.totalorder %s20, 0
          %s157 = scalar_select %p156, %s20, 0
          %s158 = smul.addr %s157, 8
          %s159 = scalar_lea.vmem %s1, %s158
        $region16: #{projection_forward.1} parent=11 // pred_fallthru
          _
        // Predicated region
        $region17: #{projection_forward.1} parent=11 // pred_check
          %p160 = pneg %p108
        $region18: #{projection_forward.1} parent=11 // pred_check_branch
          %162 = sbr.rel (%p160) target = $region20
        $region19: #{projection_forward.1} parent=11 // pred_region
          %p163 = scmp.lt.s32.totalorder %s20, 0
          %s164 = scalar_select %p163, %s20, 0
          %s165 = smul.addr %s164, 8
          %s166 = scalar_lea.vmem %s2, %s165
        $region20: #{projection_forward.1} parent=11 // pred_fallthru
          _
      $region12: #{projection_forward.1} parent=5 // pred_fallthru
        _
      %p167 = scmp.lt.s32.totalorder %s9, 2
      // Predicated region
      $region21: #{projection_forward.1} parent=5 // pred_check
        %p168 = pneg %p167
      $region22: #{projection_forward.1} parent=5 // pred_check_branch
        %170 = sbr.rel (%p168) target = $region24
      $region23: #{projection_forward.1} parent=5 // pred_region
        // Predicated region
        $region25: #{projection_forward.1} parent=23 // pred_check
          %p171 = pneg %p50
        $region26: #{projection_forward.1} parent=23 // pred_check_branch
          %173 = sbr.rel (%p171) target = $region28
        $region27: #{projection_forward.1} parent=23 // pred_region
          %s174 = sand.u32 %s40, 1
          %s175 = sand.u32 %s40, 1
          %s176 = smul.addr %s175, 8
          %s177 = scalar_lea.vmem [#allocation2], %s176
          %s178 = smul.u32 2, %s16
          %s179 = smul.addr %s178, 2
          %s180 = sadd.s32 %s18, %s179
          %s181 = smul.addr %s180, 4
          %s182 = scalar_lea.vmem %s0, %s181
          // Predicated region
          $region29: #{projection_forward.1} parent=27 // pred_check
            _
          $region30: #{projection_forward.1} parent=27 // pred_check_branch
            %184 = sbr.rel (0) target = $region32
          $region31: #{projection_forward.1} parent=27 // pred_region
            // Predicated region
            $region33: #{projection_forward.1} parent=31 // pred_check
              _
            $region34: #{projection_forward.1} parent=31 // pred_check_branch
              %186 = sbr.rel target = $region36
            $region35: #{projection_forward.1} parent=31 // pred_region
              // Predicated region
              $region48: #{projection_forward.1} parent=35 // pred_check
                _
              $region49: #{projection_forward.1} parent=35 // pred_check_branch
                %203 = sbr.rel (0) target = $region51
              $region50: #{projection_forward.1} parent=35 // pred_region
                loop: start=0, step=1, limit=1
                $region52: #{projection_forward.1} parent=50 // loop_pre_header
                  _
                $region53: #{projection_forward.1} parent=50 // loop_header
                  %s205 = sphi 0, %s209
                  %p206 = scmp.ge.s32.totalorder %s205, 1
                  %s210 = sphi %s182, %s182
                  %s211 = sphi %s177, %s177
                $region54: #{projection_forward.1} parent=50 // loop_header_branch
                  %208 = sbr.rel (%p206) target = $region58
                $region55: #{projection_forward.1} parent=50 // loop_body
                  _
                $region56: #{projection_forward.1} parent=50 // loop_footer
                  %s209 = sadd.s32 1, %s205
                $region57: #{projection_forward.1} parent=50 // loop_footer_branch
                  %204 = sbr.rel target = $region53
                $region58: #{projection_forward.1} parent=50 // loop_exit
                  _
                loop: start=0, step=1, limit=1
                $region59: #{projection_forward.1} parent=50 // loop_pre_header
                  _
                $region60: #{projection_forward.1} parent=50 // loop_header
                  %s214 = sphi 0, %s218
                  %p215 = scmp.ge.s32.totalorder %s214, 1
                  %s219 = sphi %s182, %s182
                  %s220 = sphi %s177, %s177
                $region61: #{projection_forward.1} parent=50 // loop_header_branch
                  %217 = sbr.rel (%p215) target = $region65
                $region62: #{projection_forward.1} parent=50 // loop_body
                  %v221 = vld [vmem:[%s219] sm:$0xf]
                  %222 = vst [vmem:[%s220] sm:$0xf] %v221
                  %v223 = vld [vmem:[%s219 + $0x8] sm:$0xf]
                  %224 = vst [vmem:[%s220 + $0x4] sm:$0xf] %v223
                $region63: #{projection_forward.1} parent=50 // loop_footer
                  %s218 = sadd.s32 1, %s214
                $region64: #{projection_forward.1} parent=50 // loop_footer_branch
                  %213 = sbr.rel target = $region60
                $region65: #{projection_forward.1} parent=50 // loop_exit
                  _
              $region51: #{projection_forward.1} parent=35 // pred_fallthru
                _
            $region36: #{projection_forward.1} parent=31 // pred_fallthru
              _
            // Predicated region
            $region37: #{projection_forward.1} parent=31 // pred_check
              _
            $region38: #{projection_forward.1} parent=31 // pred_check_branch
              %188 = sbr.rel (0) target = $region40
            $region39: #{projection_forward.1} parent=31 // pred_region
              loop: start=0, step=1, limit=1
              $region41: #{projection_forward.1} parent=39 // loop_pre_header
                _
              $region42: #{projection_forward.1} parent=39 // loop_header
                %s191 = sphi 0, %s195
                %p192 = scmp.ge.s32.totalorder %s191, 1
                %s196 = sphi %s182, %s182
                %s197 = sphi %s177, %s177
              $region43: #{projection_forward.1} parent=39 // loop_header_branch
                %194 = sbr.rel (%p192) target = $region47
              $region44: #{projection_forward.1} parent=39 // loop_body
                %v198 = vld [vmem:[%s196] sm:$0xf]
                %199 = vst [vmem:[%s197] sm:$0xf] %v198
                %v200 = vld [vmem:[%s196 + $0x8] sm:$0xf]
                %201 = vst [vmem:[%s197 + $0x4] sm:$0xf] %v200
              $region45: #{projection_forward.1} parent=39 // loop_footer
                %s195 = sadd.s32 1, %s191
              $region46: #{projection_forward.1} parent=39 // loop_footer_branch
                %190 = sbr.rel target = $region42
              $region47: #{projection_forward.1} parent=39 // loop_exit
                _
            $region40: #{projection_forward.1} parent=31 // pred_fallthru
              _
          $region32: #{projection_forward.1} parent=27 // pred_fallthru
            _
          %225 = vnop
        $region28: #{projection_forward.1} parent=23 // pred_fallthru
          _
      $region24: #{projection_forward.1} parent=5 // pred_fallthru
        _
      %p226 = scmp.le.s32.totalorder 1, %s9
      %p227 = scmp.lt.s32.totalorder %s9, 3
      %p228 = pnand %p226, %p227
      %p229 = pneg %p228
      // Predicated region
      $region66: #{projection_forward.1} parent=5 // pred_check
        _
      $region67: #{projection_forward.1} parent=5 // pred_check_branch
        %231 = sbr.rel (%p228) target = $region69
      $region68: #{projection_forward.1} parent=5 // pred_region
        %s232 = ssub.s32 %s9, 1
        %s233 = sand.u32 %s43, 1
        %s234 = sand.u32 %s43, 1
        %s235 = smul.addr %s234, 8
        %s236 = scalar_lea.vmem [#allocation2], %s235
        // Predicated region
        $region70: #{projection_forward.1} parent=68 // pred_check
          %p237 = pneg %p56
        $region71: #{projection_forward.1} parent=68 // pred_check_branch
          %239 = sbr.rel (%p237) target = $region73
        $region72: #{projection_forward.1} parent=68 // pred_region
          _
        $region73: #{projection_forward.1} parent=68 // pred_fallthru
          _
        %s240 = sand.u32 %s43, 1
        %s241 = sand.u32 %s43, 1
        %s242 = smul.addr %s241, 8
        %s243 = scalar_lea.vmem [#allocation2], %s242
        %p244 = pneg %p56
        %p245 = pneg %p53
        %p246 = scmp.lt.s32.totalorder %s20, 0
        %s247 = scalar_select %p246, %s20, 0
        %s248 = smul.addr %s247, 8
        %s249 = scalar_lea.vmem %s1, %s248
        %p250 = pneg %p82
        %p251 = pneg %p79
        %p252 = scmp.lt.s32.totalorder %s20, 0
        %s253 = scalar_select %p252, %s20, 0
        %s254 = smul.addr %s253, 8
        %s255 = scalar_lea.vmem %s2, %s254
        %p256 = pneg %p108
        %p257 = pneg %p105
        %p258 = pneg %p138
        %p259 = pneg %p135
        %s260 = sand.u32 %s125, 1
        %s261 = sand.u32 %s125, 1
        %s262 = smul.addr %s261, 16
        %s263 = scalar_lea.vmem [#allocation3], %s262
        %s264 = smul.u32 2, %s19
        %p265 = scmp.lt.s32.totalorder %s20, 0
        %s266 = scalar_select %p265, %s20, 0
        %s267 = smul.addr %s266, 8
        %s268 = scalar_lea.vmem %s1, %s267
        %p269 = scmp.lt.s32.totalorder %s20, 0
        %s270 = scalar_select %p269, %s20, 0
        %s271 = smul.addr %s270, 8
        %s272 = scalar_lea.vmem %s2, %s271
        %s273 = smul.u32 2, %s19
        %v274 = vld [vmem:[%s268] sm:$0xff]
        %v275 = vld [vmem:[%s272] sm:$0xff]
        %v276 = vld [vmem:[%s236] sm:$0xf]
        %278 = vset.pattern.permute.xlu0 0
        %279 = vperm.xlu0 %278, %v275
        %v280 = vpop.permute.xlu0 %279
        %vm282 = vcmask 31744
        %v284 = vsel %vm282, %v274, 0
        %vm286 = vcmask 1043456
        %v288 = vsel %vm286, %v276, 0
        %290 = vmatprep.subr.mxu0 0.0
        %291 = vmatpush1.msra.mxu0 %v288
        %292 = vmatprep.subr.mxu0 0.0
        %293 = vmatpush1.msra.mxu0 0.0
        %294 = vmatprep.subr.mxu0 0.0
        %295 = vmatpush1.msra.mxu0 0.0
        %296 = vmatprep.subr.mxu0 0.0
        %297 = vmatpush1.msra.mxu0 0.0
        %298 = vmatprep.subr.mxu0 0.0
        %299 = vmatpush1.msra.mxu0 0.0
        %300 = vmatprep.subr.mxu0 0.0
        %301 = vmatpush1.msra.mxu0 0.0
        %302 = vmatprep.subr.mxu0 0.0
        %303 = vmatpush1.msra.mxu0 0.0
        %304 = vmatprep.subr.mxu0 0.0
        %305 = vmatpush1.msra.mxu0 0.0
        %306 = vmatprep.subr.mxu0 0.0
        %307 = vmatpush1.msra.mxu0 0.0
        %308 = vmatprep.subr.mxu0 0.0
        %309 = vmatpush1.msra.mxu0 0.0
        %310 = vmatprep.subr.mxu0 0.0
        %311 = vmatpush1.msra.mxu0 0.0
        %312 = vmatprep.subr.mxu0 0.0
        %313 = vmatpush1.msra.mxu0 0.0
        %314 = vmatprep.subr.mxu0 0.0
        %315 = vmatpush1.msra.mxu0 0.0
        %316 = vmatprep.subr.mxu0 0.0
        %317 = vmatpush1.msra.mxu0 0.0
        %318 = vmatprep.subr.mxu0 0.0
        %319 = vmatpush1.msra.mxu0 0.0
        %320 = vmatprep.subr.mxu0 0.0
        %321 = vmatpush1.msra.mxu0 0.0
        %322 = vmatprep.subr.mxu0 0.0
        %323 = vmatpush1.msra.mxu0 0.0
        %324 = vmatprep.subr.mxu0 0.0
        %325 = vmatpush1.msra.mxu0 0.0
        %326 = vmatprep.subr.mxu0 0.0
        %327 = vmatpush1.msra.mxu0 0.0
        %328 = vmatprep.subr.mxu0 0.0
        %329 = vmatpush1.msra.mxu0 0.0
        %330 = vmatprep.subr.mxu0 0.0
        %331 = vmatpush1.msra.mxu0 0.0
        %332 = vmatprep.subr.mxu0 0.0
        %333 = vmatpush1.msra.mxu0 0.0
        %334 = vmatprep.subr.mxu0 0.0
        %335 = vmatpush1.msra.mxu0 0.0
        %336 = vmatprep.subr.mxu0 0.0
        %337 = vmatpush1.msra.mxu0 0.0
        %338 = vmatprep.subr.mxu0 0.0
        %339 = vmatpush1.msra.mxu0 0.0
        %340 = vmatprep.subr.mxu0 0.0
        %341 = vmatpush1.msra.mxu0 0.0
        %342 = vmatprep.subr.mxu0 0.0
        %343 = vmatpush1.msra.mxu0 0.0
        %344 = vmatprep.subr.mxu0 0.0
        %345 = vmatpush1.msra.mxu0 0.0
        %346 = vmatprep.subr.mxu0 0.0
        %347 = vmatpush1.msra.mxu0 0.0
        %348 = vmatprep.subr.mxu0 0.0
        %349 = vmatpush1.msra.mxu0 0.0
        %350 = vmatprep.subr.mxu0 0.0
        %351 = vmatpush1.msra.mxu0 0.0
        %352 = vmatprep.subr.mxu0 0.0
        %353 = vmatpush1.msra.mxu0 0.0
        %354 = vmatprep.mubr.f32.mxu0 0.0
        %355 = vmatmul.mubr.f32.gmra.mrb[0].mxu0 %v284
        %v356 = vpop.f32.mrb[0].mxu0
        %v357 = vadd.f32 %v280, %v356
        %v358 = vpop.f32.mrb[0].mxu0
        %359 = vdwg.mxu0
        %360 = vst [vmem:[%s263] sm:$0xff] %v357
        %s361 = scalar_lea.vmem %s236, 4 [#allocation2]
        %v362 = vld [vmem:[%s361] sm:$0xf]
        %v364 = vsel %vm286, %v362, 0
        %366 = vmatprep.subr.mxu0 0.0
        %367 = vmatpush1.msra.mxu0 %v364
        %368 = vmatprep.subr.mxu0 0.0
        %369 = vmatpush1.msra.mxu0 0.0
        %370 = vmatprep.subr.mxu0 0.0
        %371 = vmatpush1.msra.mxu0 0.0
        %372 = vmatprep.subr.mxu0 0.0
        %373 = vmatpush1.msra.mxu0 0.0
        %374 = vmatprep.subr.mxu0 0.0
        %375 = vmatpush1.msra.mxu0 0.0
        %376 = vmatprep.subr.mxu0 0.0
        %377 = vmatpush1.msra.mxu0 0.0
        %378 = vmatprep.subr.mxu0 0.0
        %379 = vmatpush1.msra.mxu0 0.0
        %380 = vmatprep.subr.mxu0 0.0
        %381 = vmatpush1.msra.mxu0 0.0
        %382 = vmatprep.subr.mxu0 0.0
        %383 = vmatpush1.msra.mxu0 0.0
        %384 = vmatprep.subr.mxu0 0.0
        %385 = vmatpush1.msra.mxu0 0.0
        %386 = vmatprep.subr.mxu0 0.0
        %387 = vmatpush1.msra.mxu0 0.0
        %388 = vmatprep.subr.mxu0 0.0
        %389 = vmatpush1.msra.mxu0 0.0
        %390 = vmatprep.subr.mxu0 0.0
        %391 = vmatpush1.msra.mxu0 0.0
        %392 = vmatprep.subr.mxu0 0.0
        %393 = vmatpush1.msra.mxu0 0.0
        %394 = vmatprep.subr.mxu0 0.0
        %395 = vmatpush1.msra.mxu0 0.0
        %396 = vmatprep.subr.mxu0 0.0
        %397 = vmatpush1.msra.mxu0 0.0
        %398 = vmatprep.subr.mxu0 0.0
        %399 = vmatpush1.msra.mxu0 0.0
        %400 = vmatprep.subr.mxu0 0.0
        %401 = vmatpush1.msra.mxu0 0.0
        %402 = vmatprep.subr.mxu0 0.0
        %403 = vmatpush1.msra.mxu0 0.0
        %404 = vmatprep.subr.mxu0 0.0
        %405 = vmatpush1.msra.mxu0 0.0
        %406 = vmatprep.subr.mxu0 0.0
        %407 = vmatpush1.msra.mxu0 0.0
        %408 = vmatprep.subr.mxu0 0.0
        %409 = vmatpush1.msra.mxu0 0.0
        %410 = vmatprep.subr.mxu0 0.0
        %411 = vmatpush1.msra.mxu0 0.0
        %412 = vmatprep.subr.mxu0 0.0
        %413 = vmatpush1.msra.mxu0 0.0
        %414 = vmatprep.subr.mxu0 0.0
        %415 = vmatpush1.msra.mxu0 0.0
        %416 = vmatprep.subr.mxu0 0.0
        %417 = vmatpush1.msra.mxu0 0.0
        %418 = vmatprep.subr.mxu0 0.0
        %419 = vmatpush1.msra.mxu0 0.0
        %420 = vmatprep.subr.mxu0 0.0
        %421 = vmatpush1.msra.mxu0 0.0
        %422 = vmatprep.subr.mxu0 0.0
        %423 = vmatpush1.msra.mxu0 0.0
        %424 = vmatprep.subr.mxu0 0.0
        %425 = vmatpush1.msra.mxu0 0.0
        %426 = vmatprep.subr.mxu0 0.0
        %427 = vmatpush1.msra.mxu0 0.0
        %428 = vmatprep.subr.mxu0 0.0
        %429 = vmatpush1.msra.mxu0 0.0
        %430 = vmatprep.mubr.f32.mxu0 0.0
        %431 = vmatmul.mubr.f32.gmra.mrb[0].mxu0 %v284
        %v432 = vpop.f32.mrb[0].mxu0
        %v433 = vadd.f32 %v280, %v432
        %v434 = vpop.f32.mrb[0].mxu0
        %435 = vdwg.mxu0
        %s436 = scalar_lea.vmem %s263, 8 [#allocation3]
        %437 = vst [vmem:[%s436] sm:$0xff] %v433
        %s438 = sand.u32 %s125, 1
        %s439 = sand.u32 %s125, 1
        %s440 = smul.addr %s439, 16
        %s441 = scalar_lea.vmem [#allocation3], %s440
        // Predicated region
        $region74: #{projection_forward.1} parent=68 // pred_check
          %p442 = pneg %p135
        $region75: #{projection_forward.1} parent=68 // pred_check_branch
          %444 = sbr.rel (%p442) target = $region77
        $region76: #{projection_forward.1} parent=68 // pred_region
          %s445 = smul.u32 2, %s19
          %s446 = smul.addr %s20, 2
          %s447 = sadd.s32 %s21, %s446
          %s448 = smul.addr %s445, 2
          %s449 = sadd.s32 %s447, %s448
          %s450 = smul.addr %s449, 8
          %s451 = scalar_lea.vmem %s3, %s450
          // Predicated region
          $region78: #{projection_forward.1} parent=76 // pred_check
            _
          $region79: #{projection_forward.1} parent=76 // pred_check_branch
            %453 = sbr.rel (0) target = $region81
          $region80: #{projection_forward.1} parent=76 // pred_region
            // Predicated region
            $region82: #{projection_forward.1} parent=80 // pred_check
              _
            $region83: #{projection_forward.1} parent=80 // pred_check_branch
              %455 = sbr.rel (0) target = $region85
            $region84: #{projection_forward.1} parent=80 // pred_region
              // Predicated region
              $region97: #{projection_forward.1} parent=84 // pred_check
                _
              $region98: #{projection_forward.1} parent=84 // pred_check_branch
                %472 = sbr.rel (0) target = $region100
              $region99: #{projection_forward.1} parent=84 // pred_region
                loop: start=0, step=1, limit=1
                $region101: #{projection_forward.1} parent=99 // loop_pre_header
                  _
                $region102: #{projection_forward.1} parent=99 // loop_header
                  %s474 = sphi 0, %s478
                  %p475 = scmp.ge.s32.totalorder %s474, 1
                  %s479 = sphi %s441, %s441
                  %s480 = sphi %s451, %s451
                $region103: #{projection_forward.1} parent=99 // loop_header_branch
                  %477 = sbr.rel (%p475) target = $region107
                $region104: #{projection_forward.1} parent=99 // loop_body
                  %v481 = vld [vmem:[%s479] sm:$0xff]
                  %482 = vst [vmem:[%s480] sm:$0xff] %v481
                  %v483 = vld [vmem:[%s479 + $0x8] sm:$0xff]
                  %484 = vst [vmem:[%s480 + $0x10] sm:$0xff] %v483
                $region105: #{projection_forward.1} parent=99 // loop_footer
                  %s478 = sadd.s32 1, %s474
                $region106: #{projection_forward.1} parent=99 // loop_footer_branch
                  %473 = sbr.rel target = $region102
                $region107: #{projection_forward.1} parent=99 // loop_exit
                  _
              $region100: #{projection_forward.1} parent=84 // pred_fallthru
                _
              // Predicated region
              $region108: #{projection_forward.1} parent=84 // pred_check
                _
              $region109: #{projection_forward.1} parent=84 // pred_check_branch
                %486 = sbr.rel target = $region111
              $region110: #{projection_forward.1} parent=84 // pred_region
                _
              $region111: #{projection_forward.1} parent=84 // pred_fallthru
                _
            $region85: #{projection_forward.1} parent=80 // pred_fallthru
              _
            // Predicated region
            $region86: #{projection_forward.1} parent=80 // pred_check
              _
            $region87: #{projection_forward.1} parent=80 // pred_check_branch
              %457 = sbr.rel target = $region89
            $region88: #{projection_forward.1} parent=80 // pred_region
              loop: start=0, step=1, limit=1
              $region90: #{projection_forward.1} parent=88 // loop_pre_header
                _
              $region91: #{projection_forward.1} parent=88 // loop_header
                %s460 = sphi 0, %s464
                %p461 = scmp.ge.s32.totalorder %s460, 1
                %s465 = sphi %s441, %s441
                %s466 = sphi %s451, %s451
              $region92: #{projection_forward.1} parent=88 // loop_header_branch
                %463 = sbr.rel (%p461) target = $region96
              $region93: #{projection_forward.1} parent=88 // loop_body
                %v467 = vld [vmem:[%s465] sm:$0xff]
                %468 = vst [vmem:[%s466] sm:$0xff] %v467
                %v469 = vld [vmem:[%s465 + $0x8] sm:$0xff]
                %470 = vst [vmem:[%s466 + $0x10] sm:$0xff] %v469
              $region94: #{projection_forward.1} parent=88 // loop_footer
                %s464 = sadd.s32 1, %s460
              $region95: #{projection_forward.1} parent=88 // loop_footer_branch
                %459 = sbr.rel target = $region91
              $region96: #{projection_forward.1} parent=88 // loop_exit
                _
            $region89: #{projection_forward.1} parent=80 // pred_fallthru
              _
          $region81: #{projection_forward.1} parent=76 // pred_fallthru
            _
          %487 = vnop
        $region77: #{projection_forward.1} parent=68 // pred_fallthru
          _
      $region69: #{projection_forward.1} parent=5 // pred_fallthru
        _
      %p488 = scmp.le.s32.totalorder 2, %s9
      // Predicated region
      $region112: #{projection_forward.1} parent=5 // pred_check
        %p489 = pneg %p488
      $region113: #{projection_forward.1} parent=5 // pred_check_branch
        %491 = sbr.rel (%p489) target = $region115
      $region114: #{projection_forward.1} parent=5 // pred_region
        %s492 = ssub.s32 %s9, 2
        // Predicated region
        $region116: #{projection_forward.1} parent=114 // pred_check
          %p493 = pneg %p141
        $region117: #{projection_forward.1} parent=114 // pred_check_branch
          %495 = sbr.rel (%p493) target = $region119
        $region118: #{projection_forward.1} parent=114 // pred_region
          %s496 = sand.u32 %s126, 1
          %s497 = sand.u32 %s126, 1
          %s498 = smul.addr %s497, 16
          %s499 = scalar_lea.vmem [#allocation3], %s498
        $region119: #{projection_forward.1} parent=114 // pred_fallthru
          _
      $region115: #{projection_forward.1} parent=5 // pred_fallthru
        _
    $region6: #{projection_forward.1} parent=1 // loop_footer
      %s13 = sadd.s32 1, %s9
    $region7: #{projection_forward.1} parent=1 // loop_footer_branch
      %8 = sbr.rel target = $region3
    $region8: #{projection_forward.1} parent=1 // loop_exit
      _

</llo_original>
